<compile_context>
chip_gen: v5e
topology: v5e:2x2
jax: 0.10.0
libtpu: 0.0.40
codegen_flags: <defaults>
</compile_context>

<pallas_src>
import functools

import numpy as np
import jax
import jax.numpy as jnp
from jax.experimental import pallas as pl
from jax.experimental.pallas import tpu as pltpu


def _sdpa_kernel(*refs, inv_temp, has_mask, return_comp):
    q_ref, k_ref, v_ref = refs[0], refs[1], refs[2]
    n_in = 3
    mask_ref = None
    if has_mask:
        mask_ref = refs[3]
        n_in = 4
    out_ref = refs[n_in]
    attn_ref = refs[n_in + 1]
    comp_ref = refs[n_in + 2] if return_comp else None

    # Fold 1/temperature into q once (cheaper than dividing the (TB, T) scores).
    q = q_ref[...].astype(jnp.float32) * jnp.float32(inv_temp)      # (TB, d_k)
    k = k_ref[...]                                                   # (TB, T, d_k)
    v = v_ref[...]                                                   # (TB, T, d_v)

    # scores[b, t] = sum_d q[b, d] * k[b, t, d]  (broadcast-mul + lane reduce)
    scores = jnp.sum(q[:, None, :] * k, axis=-1)                     # (TB, T) f32

    if has_mask:
        m = mask_ref[...].astype(jnp.float32)                        # (TB, T)
        scores = jnp.where(m > 0.0, jnp.float32(-1000.0), scores)

    if return_comp:
        comp_ref[...] = scores.astype(comp_ref.dtype)

    # softmax over the temporal axis (torch dim=2)
    smax = jnp.max(scores, axis=-1, keepdims=True)
    e = jnp.exp(scores - smax)
    denom = jnp.sum(e, axis=-1, keepdims=True)
    attn = e * pl.reciprocal(denom, approx=False)
    attn_ref[...] = attn.astype(attn_ref.dtype)

    # TODO(synk): training-mode dropout (p=0.1) omitted — identity in the
    # deterministic / eval forward pass.

    # out[b, d] = sum_t attn[b, t] * v[b, t, d]  (broadcast-mul + sublane reduce)
    out = jnp.sum(attn[:, :, None] * v, axis=1)                      # (TB, d_v)
    out_ref[...] = out.astype(out_ref.dtype)


def _pick_tb(B, T, d_k, d_v, in_itemsize, budget_bytes=20 * 1024 * 1024):
    """Largest batch tile (multiple of 8) whose working set fits the budget."""
    if B <= 8:
        return B
    # Dominant per-row cost: double-buffered k+v blocks + f32 mul/reduce
    # intermediates + small q/out/attn tiles.
    per_row = (2 * T * (d_k + d_v) * in_itemsize          # k, v (x2 buffers)
               + T * max(d_k, d_v) * 4                     # f32 intermediate
               + 2 * (d_k + d_v + 2 * T) * 4)              # q/out/attn/comp-ish
    tb = budget_bytes // max(per_row, 1)
    tb = int(max(8, min(tb, 256, B)))
    tb = (tb // 8) * 8
    if B >= 16:
        # keep >= 2 grid steps so both v7x TensorCores get work
        half = (((B + 1) // 2) + 7) // 8 * 8
        tb = max(8, min(tb, half))
    return tb


def _vmem_limit(TB, T, d_k, d_v, in_itemsize, out_itemsize, has_mask, return_comp):
    blk_in = (TB * d_k * in_itemsize
              + TB * T * (d_k + d_v) * in_itemsize
              + (TB * T if has_mask else 0))
    blk_out = TB * d_v * out_itemsize + TB * T * out_itemsize * (2 if return_comp else 1)
    scratch = 2 * TB * T * max(d_k, d_v) * 4 + 4 * TB * max(T, d_k, d_v) * 4
    total = 2 * (blk_in + blk_out) + scratch
    return int(min(max(2 * total, 16 * 1024 * 1024), 40 * 1024 * 1024))


def scaled_dot_product_attention(q, k, v, pad_mask=None, return_comp=False,
                                 temperature=None):
    """q: (B, d_k), k: (B, T, d_k), v: (B, T, d_v), pad_mask: (B, T) bool.

    Returns (output (B,1,d_v), attn (B,1,T)[, comp (B,1,T)]).
    """
    B, d_k = q.shape
    _, T, d_v = v.shape
    if temperature is None:
        temperature = float(np.sqrt(d_k))
    has_mask = pad_mask is not None

    in_itemsize = jnp.dtype(q.dtype).itemsize
    out_dtype = q.dtype
    out_itemsize = jnp.dtype(out_dtype).itemsize

    TB = _pick_tb(B, T, d_k, d_v, in_itemsize)
    grid = (pl.cdiv(B, TB),)
    vmem_bytes = _vmem_limit(TB, T, d_k, d_v, in_itemsize, out_itemsize,
                             has_mask, return_comp)

    inputs = [q, k, v]
    in_specs = [
        pl.BlockSpec((TB, d_k), lambda i: (i, 0)),
        pl.BlockSpec((TB, T, d_k), lambda i: (i, 0, 0)),
        pl.BlockSpec((TB, T, d_v), lambda i: (i, 0, 0)),
    ]
    if has_mask:
        inputs.append(pad_mask.astype(jnp.int8))
        in_specs.append(pl.BlockSpec((TB, T), lambda i: (i, 0)))

    out_shape = [
        jax.ShapeDtypeStruct((B, d_v), out_dtype),    # output
        jax.ShapeDtypeStruct((B, T), out_dtype),      # attn
    ]
    out_specs = [
        pl.BlockSpec((TB, d_v), lambda i: (i, 0)),
        pl.BlockSpec((TB, T), lambda i: (i, 0)),
    ]
    if return_comp:
        out_shape.append(jax.ShapeDtypeStruct((B, T), out_dtype))   # comp
        out_specs.append(pl.BlockSpec((TB, T), lambda i: (i, 0)))

    kernel = functools.partial(
        _sdpa_kernel,
        inv_temp=1.0 / float(temperature),
        has_mask=has_mask,
        return_comp=return_comp,
    )

    results = pl.pallas_call(
        kernel,
        out_shape=tuple(out_shape),
        grid_spec=pltpu.PrefetchScalarGridSpec(
            num_scalar_prefetch=0,
            grid=grid,
            in_specs=in_specs,
            out_specs=tuple(out_specs),
        ),
        compiler_params=pltpu.CompilerParams(
            dimension_semantics=("parallel",),
            vmem_limit_bytes=vmem_bytes,
        ),
    )(*inputs)

    if return_comp:
        out2, attn2, comp2 = results
        return out2[:, None, :], attn2[:, None, :], comp2[:, None, :]
    out2, attn2 = results
    return out2[:, None, :], attn2[:, None, :]


if __name__ == "__main__":
    key = jax.random.PRNGKey(0)
    B, T, d_k, d_v = 2, 8, 32, 32
    kq, kk, kv, km = jax.random.split(key, 4)

    q = jax.random.normal(kq, (B, d_k), dtype=jnp.float32)
    k = jax.random.normal(kk, (B, T, d_k), dtype=jnp.float32)
    v = jax.random.normal(kv, (B, T, d_v), dtype=jnp.float32)
    pad_mask = jax.random.bernoulli(km, 0.25, (B, T))
    temperature = float(np.sqrt(d_k))

    def reference(q, k, v, mask):
        s = jnp.einsum("bd,btd->bt", q, k) / temperature
        if mask is not None:
            s = jnp.where(mask, -1000.0, s)
        a = jax.nn.softmax(s, axis=-1)
        o = jnp.einsum("bt,btd->bd", a, v)
        return o[:, None, :], a[:, None, :], s[:, None, :]

    # Masked path, no comp output.
    out, attn = scaled_dot_product_attention(
        q, k, v, pad_mask=pad_mask, temperature=temperature)
    jax.block_until_ready((out, attn))
    o_ref, a_ref, _ = reference(q, k, v, pad_mask)
    assert out.shape == (B, 1, d_v) and attn.shape == (B, 1, T)
    assert np.allclose(np.asarray(out), np.asarray(o_ref), atol=1e-5)
    assert np.allclose(np.asarray(attn), np.asarray(a_ref), atol=1e-5)

    # Unmasked path with comp output (exercises the specialized variants).
    out2, attn2, comp2 = scaled_dot_product_attention(
        q, k, v, pad_mask=None, return_comp=True, temperature=temperature)
    jax.block_until_ready((out2, attn2, comp2))
    o2_ref, a2_ref, s2_ref = reference(q, k, v, None)
    assert np.allclose(np.asarray(out2), np.asarray(o2_ref), atol=1e-5)
    assert np.allclose(np.asarray(attn2), np.asarray(a2_ref), atol=1e-5)
    assert np.allclose(np.asarray(comp2), np.asarray(s2_ref), atol=1e-5)

    print("KERNEL_OK")
</pallas_src>

<mosaic_0001>
module attributes {stable_mosaic.version = 11 : i64} {
  func.func @_sdpa_kernel(%arg0: i32, %arg1: memref<2x32xf32, #tpu.memory_space<vmem>>, %arg2: memref<2x8x32xf32, #tpu.memory_space<vmem>>, %arg3: memref<2x8x32xf32, #tpu.memory_space<vmem>>, %arg4: memref<2x8xi8, #tpu.memory_space<vmem>>, %arg5: memref<2x32xf32, #tpu.memory_space<vmem>>, %arg6: memref<2x8xf32, #tpu.memory_space<vmem>>) attributes {dimension_semantics = [#tpu.dimension_semantics<parallel>], iteration_bounds = array<i64: 1>, scalar_prefetch = 0 : i64, scratch_operands = 0 : i64, tpu.core_type = #tpu.core_type<tc>, window_params = [{transform_indices = @transform_0, window_bounds = array<i64: 2, 32>}, {transform_indices = @transform_1, window_bounds = array<i64: 2, 8, 32>}, {transform_indices = @transform_2, window_bounds = array<i64: 2, 8, 32>}, {transform_indices = @transform_3, window_bounds = array<i64: 2, 8>}, {transform_indices = @transform_4, window_bounds = array<i64: 2, 32>}, {transform_indices = @transform_5, window_bounds = array<i64: 2, 8>}]} {
    %c0 = arith.constant 0 : index
    %c0_0 = arith.constant 0 : index
    %0 = vector.load %arg1[%c0, %c0_0] : memref<2x32xf32, #tpu.memory_space<vmem>>, vector<2x32xf32>
    %cst = arith.constant 0.176776692 : f32
    %1 = vector.broadcast %cst : f32 to vector<2x32xf32>
    %2 = arith.mulf %0, %1 : vector<2x32xf32>
    %c0_1 = arith.constant 0 : index
    %c0_2 = arith.constant 0 : index
    %c0_3 = arith.constant 0 : index
    %3 = vector.load %arg2[%c0_1, %c0_2, %c0_3] : memref<2x8x32xf32, #tpu.memory_space<vmem>>, vector<2x8x32xf32>
    %c0_4 = arith.constant 0 : index
    %c0_5 = arith.constant 0 : index
    %c0_6 = arith.constant 0 : index
    %4 = vector.load %arg3[%c0_4, %c0_5, %c0_6] : memref<2x8x32xf32, #tpu.memory_space<vmem>>, vector<2x8x32xf32>
    %5 = vector.shape_cast %2 : vector<2x32xf32> to vector<2x1x32xf32>
    %6 = vector.broadcast %5 : vector<2x1x32xf32> to vector<2x8x32xf32>
    %7 = arith.mulf %6, %3 : vector<2x8x32xf32>
    %cst_7 = arith.constant dense<0.000000e+00> : vector<2x8xf32>
    %8 = vector.multi_reduction <add>, %7, %cst_7 [2] : vector<2x8x32xf32> to vector<2x8xf32>
    %c0_8 = arith.constant 0 : index
    %c0_9 = arith.constant 0 : index
    %9 = vector.load %arg4[%c0_8, %c0_9] : memref<2x8xi8, #tpu.memory_space<vmem>>, vector<2x8xi8>
    %10 = arith.sitofp %9 : vector<2x8xi8> to vector<2x8xf32>
    %cst_10 = arith.constant 0.000000e+00 : f32
    %11 = vector.broadcast %cst_10 : f32 to vector<2x8xf32>
    %12 = arith.cmpf ogt, %10, %11 : vector<2x8xf32>
    %cst_11 = arith.constant -1.000000e+03 : f32
    %13 = vector.broadcast %cst_11 : f32 to vector<2x8xf32>
    %14 = arith.select %12, %13, %8 : vector<2x8xi1>, vector<2x8xf32>
    %cst_12 = arith.constant dense<0xFF800000> : vector<2xf32>
    %15 = vector.multi_reduction <maximumf>, %14, %cst_12 [1] : vector<2x8xf32> to vector<2xf32>
    %16 = vector.shape_cast %15 : vector<2xf32> to vector<2x1xf32>
    %17 = vector.broadcast %16 : vector<2x1xf32> to vector<2x8xf32>
    %18 = arith.subf %14, %17 : vector<2x8xf32>
    %19 = math.exp %18 : vector<2x8xf32>
    %cst_13 = arith.constant dense<0.000000e+00> : vector<2xf32>
    %20 = vector.multi_reduction <add>, %19, %cst_13 [1] : vector<2x8xf32> to vector<2xf32>
    %21 = vector.shape_cast %20 : vector<2xf32> to vector<2x1xf32>
    %22 = tpu.reciprocal %21 : vector<2x1xf32> -> vector<2x1xf32>
    %23 = vector.broadcast %22 : vector<2x1xf32> to vector<2x8xf32>
    %24 = arith.mulf %19, %23 : vector<2x8xf32>
    %c0_14 = arith.constant 0 : index
    %c0_15 = arith.constant 0 : index
    %25 = vector.load %arg6[%c0_14, %c0_15] : memref<2x8xf32, #tpu.memory_space<vmem>>, vector<2x8xf32>
    tpu.vector_store %arg6[%c0_14, %c0_15], %24 {strides = array<i32>} : memref<2x8xf32, #tpu.memory_space<vmem>>, vector<2x8xf32>,
    %26 = vector.shape_cast %24 : vector<2x8xf32> to vector<2x8x1xf32>
    %27 = vector.broadcast %26 : vector<2x8x1xf32> to vector<2x8x32xf32>
    %28 = arith.mulf %27, %4 : vector<2x8x32xf32>
    %cst_16 = arith.constant dense<0.000000e+00> : vector<2x32xf32>
    %29 = vector.multi_reduction <add>, %28, %cst_16 [1] : vector<2x8x32xf32> to vector<2x32xf32>
    %c0_17 = arith.constant 0 : index
    %c0_18 = arith.constant 0 : index
    %30 = vector.load %arg5[%c0_17, %c0_18] : memref<2x32xf32, #tpu.memory_space<vmem>>, vector<2x32xf32>
    tpu.vector_store %arg5[%c0_17, %c0_18], %29 {strides = array<i32>} : memref<2x32xf32, #tpu.memory_space<vmem>>, vector<2x32xf32>,
    return
  }
  func.func @transform_0(%arg0: i32) -> (i32, i32) {
    %c0_i32 = arith.constant 0 : i32
    %c0_i32_0 = arith.constant 0 : i32
    return %arg0, %c0_i32 : i32, i32
  }
  func.func @transform_1(%arg0: i32) -> (i32, i32, i32) {
    %c0_i32 = arith.constant 0 : i32
    %c0_i32_0 = arith.constant 0 : i32
    %c0_i32_1 = arith.constant 0 : i32
    return %arg0, %c0_i32, %c0_i32_0 : i32, i32, i32
  }
  func.func @transform_2(%arg0: i32) -> (i32, i32, i32) {
    %c0_i32 = arith.constant 0 : i32
    %c0_i32_0 = arith.constant 0 : i32
    %c0_i32_1 = arith.constant 0 : i32
    return %arg0, %c0_i32, %c0_i32_0 : i32, i32, i32
  }
  func.func @transform_3(%arg0: i32) -> (i32, i32) {
    %c0_i32 = arith.constant 0 : i32
    %c0_i32_0 = arith.constant 0 : i32
    return %arg0, %c0_i32 : i32, i32
  }
  func.func @transform_4(%arg0: i32) -> (i32, i32) {
    %c0_i32 = arith.constant 0 : i32
    %c0_i32_0 = arith.constant 0 : i32
    return %arg0, %c0_i32 : i32, i32
  }
  func.func @transform_5(%arg0: i32) -> (i32, i32) {
    %c0_i32 = arith.constant 0 : i32
    %c0_i32_0 = arith.constant 0 : i32
    return %arg0, %c0_i32 : i32, i32
  }
}

</mosaic_0001>

<llo_original>
// kernel: tpu_custom_call.1
$region0: #{tpu_custom_call.1}
  #allocation0 [shape = 'u32[]', space=smem, size = 0x4, offset = 0x4, fixed_abs, tag = 'smem constant byte address 0x4 - core index']
  #allocation1 [shape = 'u32[72,128]{1,0:T(1,128)}', space=vmem, size = 0x9000, scoped, tag = 'internal scratch']
  %s0 = inlined_call_operand.hbm [shape: f32[2,32], index: 0, kind: input, shape index: {}]
  %s1 = inlined_call_operand.hbm [shape: f32[2,8,32], index: 1, kind: input, shape index: {}]
  %s2 = inlined_call_operand.hbm [shape: f32[2,8,32], index: 2, kind: input, shape index: {}]
  %s3 = inlined_call_operand.vmem [shape: s8[2,8], index: 3, kind: input, shape index: {}]
  %s4 = inlined_call_operand.hbm [shape: f32[2,32], index: 4, kind: output, shape index: {0}]
  %s5 = inlined_call_operand.hbm [shape: f32[2,8], index: 5, kind: output, shape index: {1}]
  %6 = xla_tuple %s4, %s5
  %s7 = sld [smem:[#allocation0]]
  $region46: #{tpu_custom_call.1} parent=0
    _
  %s9 = ssub.s32 1, %s7
  %s10 = scalar_select 0, %s9, %s7
  $region1: #{tpu_custom_call.1} parent=0
    #allocation2 [shape = 'u8[1024]{0}', space=vmem, size = 0x400, scoped, tag = 'input window, operand 0, single buffered']
    #allocation3 [shape = 's32[1]{0}', space=sflag, size = 0x4, scoped, tag = 'scoped memory for tpu_custom_call.1']
    #allocation4 [shape = 's32[1]{0}', space=sflag, size = 0x4, scoped, tag = 'scoped memory for tpu_custom_call.1']
    #allocation5 [shape = 'u8[8192]{0}', space=vmem, size = 0x2000, scoped, tag = 'input window, operand 1, single buffered']
    #allocation6 [shape = 's32[1]{0}', space=sflag, size = 0x4, scoped, tag = 'scoped memory for tpu_custom_call.1']
    #allocation7 [shape = 'u8[8192]{0}', space=vmem, size = 0x2000, scoped, tag = 'input window, operand 2, single buffered']
    #allocation8 [shape = 'u8[1024]{0}', space=vmem, size = 0x400, scoped, tag = 'output window, operand 0, single buffered']
    #allocation9 [shape = 'u8[1024]{0}', space=vmem, size = 0x400, scoped, tag = 'output window, operand 1, single buffered']
    #allocation10 [shape = 's32[1]{0}', space=sflag, size = 0x4, scoped, tag = 'scoped memory for tpu_custom_call.1']
    %11 = vsyncpa [#allocation3], 0
    %12 = vsyncpa [#allocation6], 0
    %13 = vsyncpa [#allocation4], 0
    %14 = vsyncpa [#allocation10], 0
    // Predicated region
    $region2: #{tpu_custom_call.1} parent=1 // pred_check
      _
    $region3: #{tpu_custom_call.1} parent=1 // pred_check_branch
      %16 = sbr.rel (0) target = $region5
    $region4: #{tpu_custom_call.1} parent=1 // pred_region
      %18 = vsyncadd [#allocation3], 0
      %s20 = sshll.u32 %s0, 4
      %s21 = int_to_ptr.hbm [resolvable:$true] %s20
      %s22 = sshll.u32 [#allocation2], 4
      %s23 = int_to_ptr.vmem [resolvable:$true] %s22
      %25 = dma.hbm_to_vmem [thread:$0]  %s21, 32, %s23, [#allocation3]
    $region5: #{tpu_custom_call.1} parent=1 // pred_fallthru
      _
    // Predicated region
    $region6: #{tpu_custom_call.1} parent=1 // pred_check
      _
    $region7: #{tpu_custom_call.1} parent=1 // pred_check_branch
      %27 = sbr.rel (0) target = $region9
    $region8: #{tpu_custom_call.1} parent=1 // pred_region
      %29 = vsyncadd [#allocation6], 0
      %s30 = sshll.u32 %s1, 4
      %s31 = int_to_ptr.hbm [resolvable:$true] %s30
      %s32 = sshll.u32 [#allocation5], 4
      %s33 = int_to_ptr.vmem [resolvable:$true] %s32
      %38 = dma.hbm_to_vmem [thread:$0]  %s31, 256, %s33, [#allocation6], 128, 128, 8
    $region9: #{tpu_custom_call.1} parent=1 // pred_fallthru
      _
    // Predicated region
    $region10: #{tpu_custom_call.1} parent=1 // pred_check
      _
    $region11: #{tpu_custom_call.1} parent=1 // pred_check_branch
      %40 = sbr.rel (0) target = $region13
    $region12: #{tpu_custom_call.1} parent=1 // pred_region
      %42 = vsyncadd [#allocation6], 0
      %s43 = sshll.u32 %s2, 4
      %s44 = int_to_ptr.hbm [resolvable:$true] %s43
      %s45 = sshll.u32 [#allocation7], 4
      %s46 = int_to_ptr.vmem [resolvable:$true] %s45
      %51 = dma.hbm_to_vmem [thread:$0]  %s44, 256, %s46, [#allocation6], 128, 128, 8
    $region13: #{tpu_custom_call.1} parent=1 // pred_fallthru
      _
    // Predicated region
    $region14: #{tpu_custom_call.1} parent=1 // pred_check
      _
    $region15: #{tpu_custom_call.1} parent=1 // pred_check_branch
      %53 = sbr.rel (0) target = $region17
    $region16: #{tpu_custom_call.1} parent=1 // pred_region
      _
    $region17: #{tpu_custom_call.1} parent=1 // pred_fallthru
      _
    // Predicated region
    $region18: #{tpu_custom_call.1} parent=1 // pred_check
      _
    $region19: #{tpu_custom_call.1} parent=1 // pred_check_branch
      %55 = sbr.rel (0) target = $region21
    $region20: #{tpu_custom_call.1} parent=1 // pred_region
      %57 = dma.done [#allocation3], 32
    $region21: #{tpu_custom_call.1} parent=1 // pred_fallthru
      _
    // Predicated region
    $region22: #{tpu_custom_call.1} parent=1 // pred_check
      _
    $region23: #{tpu_custom_call.1} parent=1 // pred_check_branch
      %59 = sbr.rel (0) target = $region25
    $region24: #{tpu_custom_call.1} parent=1 // pred_region
      %61 = dma.done [#allocation6], 256
    $region25: #{tpu_custom_call.1} parent=1 // pred_fallthru
      _
    // Predicated region
    $region26: #{tpu_custom_call.1} parent=1 // pred_check
      _
    $region27: #{tpu_custom_call.1} parent=1 // pred_check_branch
      %63 = sbr.rel (0) target = $region29
    $region28: #{tpu_custom_call.1} parent=1 // pred_region
      %65 = dma.done [#allocation6], 256
    $region29: #{tpu_custom_call.1} parent=1 // pred_fallthru
      _
    %v66 = vld [vmem:[#allocation2] sm:$0x3]
    %v67 = vmul.f32 %v66, 0.17677669
    %v68 = vld [vmem:[#allocation5] sm:$0xff]
    %v69 = vld [vmem:[#allocation5 + $0x8] sm:$0xff]
    %v70 = vld [vmem:[#allocation7] sm:$0xff]
    %v71 = vld [vmem:[#allocation7 + $0x8] sm:$0xff]
    %v73 = vrot.slane %v67, 1
    %v74 = vperm.slane %v67, 0
    %v75 = vperm.slane %v73, 0
    %v78 = vmul.f32 %v74, %v68
    %v79 = vmul.f32 %v75, %v69
    %vm80 = vcmask 261120
    %v81 = vsel %vm80, %v78, 0.0
    %82 = vadd.xlane.f32.xlu0 %v81
    %v83 = vpop.xlane.xlu0 %82
    %v84 = vsel %vm80, %v79, 0.0
    %85 = vadd.xlane.f32.xlu0 %v84
    %v86 = vpop.xlane.xlu0 %85
    %v87 = vld [vmem:[%s3] sm:$0x1]
    %v88 = vunpack.c.0.s8 %v87
    %v89 = vcvt.s32.f32 %v88
    %vm90 = vcmp.gt.f32.partialorder %v89, 0.0
    %v94 = vunpack.c.l.s4 839922192
    %v95 = vunpack.c.0.s8 %v94
    %v96 = vperm.slane %v83, %v95
    %v98 = vunpack.c.l.s4 1985246804
    %v99 = vunpack.c.0.s8 %v98
    %v100 = vperm.slane %v83, %v99
    %v102 = vunpack.c.l.s4 839922192
    %v103 = vunpack.c.0.s8 %v102
    %v104 = vperm.slane %v86, %v103
    %v106 = vunpack.c.l.s4 1985246804
    %v107 = vunpack.c.0.s8 %v106
    %v108 = vperm.slane %v86, %v107
    %109 = vst [vmem:[#allocation1] ss:$2 sm:$0xff] %v96
    %s110 = scalar_lea.vmem [#allocation1], 1
    %111 = vst [vmem:[%s110] ss:$2 sm:$0xff] %v100
    %v112 = vld.sshfl [vmem:[#allocation1] sm:$0xff pattern:$0x75316420]
    %s113 = scalar_lea.vmem [#allocation1], 16
    %114 = vst [vmem:[%s113] ss:$2 sm:$0xff] %v104
    %s115 = scalar_lea.vmem [#allocation1], 17
    %116 = vst [vmem:[%s115] ss:$2 sm:$0xff] %v108
    %v117 = vld.sshfl [vmem:[#allocation1 + $0x10] sm:$0xff pattern:$0x75316420]
    %118 = vset.pattern.permute.xlu0 0
    %119 = vperm.xlu0 %118, %v112
    %v120 = vpop.permute.xlu0 %119
    %121 = vset.pattern.permute.xlu0 0
    %122 = vperm.xlu0 %121, %v117
    %v123 = vpop.permute.xlu0 %122
    %v124 = vlaneseq
    %v125 = vand.u32 %v124, 127
    %v126 = vperm.slane %v120, %v125
    %v127 = vperm.slane %v123, %v125
    %vm128 = vcmask 1041409
    %v129 = vsel %vm128, %v127, %v126
    %v131 = vsel %vm90, -1000.0, %v129
    %vm132 = vcmask 58368
    %v133 = vsel %vm132, %v131, -inf
    %134 = vmax.xlane.f32.xlu0 %v133
    %v135 = vpop.xlane.xlu0 %134
    %v136 = vsub.f32 %v131, %v135
    %v137 = vmul.f32 %v136, 1.442695
    %v138 = vpow.pop %v137
    %v139 = vsel %vm132, %v138, 0.0
    %140 = vadd.xlane.f32.xlu0 %v139
    %v141 = vpop.xlane.xlu0 %140
    %v142 = vrcp.pop %v141
    %v143 = vmul.f32 %v141, %v142
    %v144 = vsub.f32 1.0, %v143
    %v145 = vmul.f32 %v142, %v144
    %v146 = vadd.f32 %v142, %v145
    %vm147 = vweird.f32 %v141
    %vm148 = vweird.f32 %v142
    %vm149 = vmor %vm147, %vm148
    %v150 = vsel %vm149, %v142, %v146
    %v151 = vand.u32 2147483647, %v141
    %vm152 = vcmp.eq.f32.partialorder %v151, 8.507059e+37
    %v153 = vand.u32 %v141, 2147483648
    %v154 = vor.u32 1.1754944e-38, %v153
    %v155 = vsel %vm152, %v154, %v150
    %v156 = vmul.f32 %v138, %v155
    %157 = vst.msk [vmem:[#allocation9] sm:$0x3] %vm132, %v156
    %v158 = vperm.slane %v156, 0
    %v159 = vlaneseq
    %v160 = vshrl.u32 %v159, 7
    %162 = vset.pattern.permute.xlu0 %v160
    %163 = vperm.xlu0 %162, %v158
    %v164 = vpop.permute.xlu0 %163
    %v165 = vperm.slane %v156, 1
    %v166 = vlaneseq
    %v167 = vshrl.u32 %v166, 7
    %169 = vset.pattern.permute.xlu0 %v167
    %170 = vperm.xlu0 %169, %v165
    %v171 = vpop.permute.xlu0 %170
    %v172 = vmul.f32 %v164, %v70
    %v173 = vmul.f32 %v171, %v71
    %v174 = vsel %vm80, %v172, 0.0
    %v175 = vrot.slane %v174, 4
    %v176 = vadd.f32 %v174, %v175
    %v177 = vrot.slane %v176, 2
    %v178 = vadd.f32 %v176, %v177
    %v179 = vrot.slane %v178, 1
    %v180 = vadd.f32 %v178, %v179
    %v181 = vsel %vm80, %v173, 0.0
    %v182 = vrot.slane %v181, 4
    %v183 = vadd.f32 %v181, %v182
    %v184 = vrot.slane %v183, 2
    %v185 = vadd.f32 %v183, %v184
    %v186 = vrot.slane %v185, 1
    %v187 = vadd.f32 %v185, %v186
    %v190 = vsel %vm128, %v187, %v180
    %vm192 = vcmask 254976
    %193 = vst.msk [vmem:[#allocation8] sm:$0x3] %vm192, %v190
    // Predicated region
    $region30: #{tpu_custom_call.1} parent=1 // pred_check
      _
    $region31: #{tpu_custom_call.1} parent=1 // pred_check_branch
      %195 = sbr.rel (0) target = $region33
    $region32: #{tpu_custom_call.1} parent=1 // pred_region
      %197 = vsyncadd [#allocation4], 0
      %s199 = sshll.u32 [#allocation8], 4
      %s200 = int_to_ptr.vmem [resolvable:$true] %s199
      %s201 = sshll.u32 %s4, 4
      %s202 = int_to_ptr.hbm [resolvable:$true] %s201
      %204 = dma.vmem_to_hbm [thread:$0]  %s200, 32, %s202, [#allocation4]
    $region33: #{tpu_custom_call.1} parent=1 // pred_fallthru
      _
    // Predicated region
    $region34: #{tpu_custom_call.1} parent=1 // pred_check
      _
    $region35: #{tpu_custom_call.1} parent=1 // pred_check_branch
      %206 = sbr.rel (0) target = $region37
    $region36: #{tpu_custom_call.1} parent=1 // pred_region
      %208 = vsyncadd [#allocation10], 0
      %s210 = sshll.u32 [#allocation9], 4
      %s211 = int_to_ptr.vmem [resolvable:$true] %s210
      %s212 = sshll.u32 %s5, 4
      %s213 = int_to_ptr.hbm [resolvable:$true] %s212
      %215 = dma.vmem_to_hbm [thread:$0]  %s211, 32, %s213, [#allocation10]
    $region37: #{tpu_custom_call.1} parent=1 // pred_fallthru
      _
    // Predicated region
    $region38: #{tpu_custom_call.1} parent=1 // pred_check
      _
    $region39: #{tpu_custom_call.1} parent=1 // pred_check_branch
      %217 = sbr.rel (0) target = $region41
    $region40: #{tpu_custom_call.1} parent=1 // pred_region
      %219 = dma.done [#allocation4], 32
    $region41: #{tpu_custom_call.1} parent=1 // pred_fallthru
      _
    // Predicated region
    $region42: #{tpu_custom_call.1} parent=1 // pred_check
      _
    $region43: #{tpu_custom_call.1} parent=1 // pred_check_branch
      %221 = sbr.rel (0) target = $region45
    $region44: #{tpu_custom_call.1} parent=1 // pred_region
      %223 = dma.done [#allocation10], 32
    $region45: #{tpu_custom_call.1} parent=1 // pred_fallthru
      _
    %224 = vsyncpa [#allocation3], 1
    %225 = vsyncpa [#allocation6], 1
    %226 = vsyncpa [#allocation4], 1
    %227 = vsyncpa [#allocation10], 1

</llo_original>
